<compile_context>
chip_gen: v5e
topology: v5e:2x2
jax: 0.10.0
libtpu: 0.0.40
codegen_flags: <defaults>
</compile_context>

<pallas_src>
import jax
import jax.numpy as jnp
import numpy as np
from jax import lax
from jax.experimental import pallas as pl
from jax.experimental.pallas import tpu as pltpu

# ----- hyperparameters mirroring CNNBiLSTMModel.__init__ -----
C_IN = 4       # input_channels
T_IN = 16      # input_time
C_OUT = 64     # conv1 out_channels
K = 5          # conv1 kernel_size (padding=2 -> "same" length)
H = 32         # LSTM hidden size (bidirectional -> 2*H features into fc)
BN_EPS = 1e-5
KC_PAD = 32    # K*C_IN (=20) zero-padded to a lane/MXU-friendly contraction width


# ------------------------- fused Pallas kernel -------------------------

def fused_cnn_bilstm_kernel(xp_ref, wconv_ref, shift_ref, wihf_ref, wihr_ref,
                            whhf_ref, bf_ref, br_ref, fcw_ref, fcb_ref, out_ref):
    """Single fused forward pass.

    xp_ref:    (T*B, 32)    im2col patches (K*Cin zero-padded to 32), rows ordered
                            (l, b, pair) so pool pairs are adjacent and the pooled
                            result comes out t-major.
    wconv_ref: (32, 64)     packed conv weight with BN scale folded in
    shift_ref: (1, 64)      folded conv-bias + BatchNorm shift (inference)
    wihf_ref:  (64, 128)    W_ih forward, transposed, gate order [i,f,g,o]
    wihr_ref:  (64, 128)    W_ih reverse, transposed
    whhf_ref:  (32, 128)    W_hh forward, transposed
    bf_ref/br_ref: (1, 128) b_ih + b_hh per direction
    fcw_ref:   (1, 64), fcb_ref: (1, 1)
    out_ref:   (B, 1)
    """
    B = out_ref.shape[0]
    TB = xp_ref.shape[0]
    T = TB // B
    L = T // 2
    Co = wconv_ref.shape[1]
    Hh = whhf_ref.shape[0]
    G4 = 4 * Hh

    # --- Conv1d (im2col) + folded BatchNorm + ReLU: one MXU matmul, + shift only ---
    y = jnp.dot(xp_ref[...], wconv_ref[...], preferred_element_type=jnp.float32)
    y = jnp.maximum(y + shift_ref[...], 0.0)                  # (T*B, 64)

    # --- MaxPool1d(2): pool pairs are adjacent rows; pooled rows come out t-major (l,b) ---
    y3 = y.reshape(L * B, 2, Co)
    pooled = jnp.maximum(y3[:, 0, :], y3[:, 1, :])            # (L*B, 64), t-major

    # --- forward-direction input projection (+bias) hoisted out of the recurrence ---
    gx_f = jnp.dot(pooled, wihf_ref[...],
                   preferred_element_type=jnp.float32) + bf_ref[...]   # (L*B, 128)

    # invariant recurrent weight loaded once, outside the serial loop
    w_hh_f = whhf_ref[...]

    # full-vreg gate activations: tanh on g's lanes, sigmoid elsewhere (one mask select)
    lane = lax.broadcasted_iota(jnp.int32, (B, G4), 1)
    g_lanes = (lane >= 2 * Hh) & (lane < 3 * Hh)

    def gate_act(gates):
        act = jnp.where(g_lanes, jnp.tanh(gates), jax.nn.sigmoid(gates))
        return (act[:, 0:Hh], act[:, Hh:2 * Hh],
                act[:, 2 * Hh:3 * Hh], act[:, 3 * Hh:4 * Hh])

    # --- forward LSTM: statically unrolled; only h @ W_hh + gate math is serial ---
    h = jnp.zeros((B, Hh), jnp.float32)
    c = jnp.zeros((B, Hh), jnp.float32)
    for t in range(L):
        gates = (gx_f[t * B:(t + 1) * B, :]
                 + jnp.dot(h, w_hh_f, preferred_element_type=jnp.float32))
        i, f, g, o = gate_act(gates)
        c = f * c + i * g
        h = o * jnp.tanh(c)
    h_fwd = h

    # --- reverse LSTM: lstm_out[:, -1, H:] is the reverse direction's FIRST step
    #     (input x[L-1], zero initial h/c), so one cell with NO h@W_hh matmul suffices.
    #     NOTE: valid only because h0 == c0 == 0 and only the last timestep is read. ---
    gates_r = (jnp.dot(pooled[(L - 1) * B:L * B, :], wihr_ref[...],
                       preferred_element_type=jnp.float32) + br_ref[...])
    i, f, g, o = gate_act(gates_r)
    h_bwd = o * jnp.tanh(i * g)                               # c0 == 0  ->  c = i*g

    # --- Linear(64 -> 1): VPU multiply + cross-lane sum (no N=1 MXU matmul tail) ---
    h_cat = jnp.concatenate([h_fwd, h_bwd], axis=1)           # (B, 64)
    out_ref[...] = (jnp.sum(h_cat * fcw_ref[...], axis=-1, keepdims=True)
                    + fcb_ref[...])


# ------------------------- wrapper (glue) -------------------------

def pallas_forward(x, p):
    # mirror the PyTorch forward's shape handling
    if x.ndim == 4 and x.shape[1] == 1:
        x = x[:, 0]                                  # squeeze(1)
    if x.shape[1] != C_IN:
        x = jnp.transpose(x, (0, 2, 1))              # permute(0, 2, 1)

    B, _, T = x.shape
    L = T // 2
    pad = K // 2
    KC = K * C_IN

    # im2col, channels-last. Row ordering (l, b, pair): pool pairs adjacent, pooled
    # result t-major so the kernel's per-step read is a contiguous static slice.
    xc = jnp.transpose(x, (0, 2, 1))                 # (B, T, Cin)
    x_pad = jnp.pad(xc, ((0, 0), (pad, pad), (0, 0)))
    idx = jnp.arange(T)[:, None] + jnp.arange(K)[None, :]      # (T, K)
    patches = x_pad[:, idx, :]                       # (B, T, K, Cin)
    patches = patches.reshape(B, L, 2, K, C_IN)
    patches = jnp.transpose(patches, (1, 0, 2, 3, 4))          # (L, B, 2, K, Cin)
    x_patches = patches.reshape(T * B, KC).astype(jnp.float32)
    x_patches = jnp.pad(x_patches, ((0, 0), (0, KC_PAD - KC)))  # pad contraction to 32

    # conv weight (out, in, k) -> (k*in, out); fold BN scale into the weight, fold
    # conv bias + BN into the shift.
    inv = 1.0 / jnp.sqrt(p["bn_var"] + BN_EPS)
    scale = p["bn_gamma"] * inv                                          # (64,)
    w_conv = jnp.transpose(p["conv_w"], (2, 1, 0)).reshape(KC, C_OUT).astype(jnp.float32)
    w_conv = w_conv * scale[None, :]
    w_conv = jnp.pad(w_conv, ((0, KC_PAD - KC), (0, 0)))
    shift = ((p["conv_b"] - p["bn_mean"]) * scale + p["bn_beta"]).reshape(1, C_OUT)

    # LSTM / FC weight packing (gate order [i, f, g, o] as in PyTorch fused weights).
    # W_hh_reverse is intentionally NOT passed: its contribution is exactly zero
    # (zero initial state, single reverse step consumed).
    w_ih_f = p["w_ih_f"].T.astype(jnp.float32)                           # (64, 128)
    w_ih_r = p["w_ih_r"].T.astype(jnp.float32)                           # (64, 128)
    w_hh_f = p["w_hh_f"].T.astype(jnp.float32)                           # (32, 128)
    b_f = (p["b_ih_f"] + p["b_hh_f"]).reshape(1, 4 * H)
    b_r = (p["b_ih_r"] + p["b_hh_r"]).reshape(1, 4 * H)
    fc_w = p["fc_w"].reshape(1, 2 * H)                                   # (1, 64)
    fc_b = p["fc_b"].reshape(1, 1)

    out = pl.pallas_call(
        fused_cnn_bilstm_kernel,
        out_shape=jax.ShapeDtypeStruct((B, 1), jnp.float32),
        in_specs=[pl.BlockSpec(memory_space=pltpu.MemorySpace.VMEM)] * 10,
        out_specs=pl.BlockSpec(memory_space=pltpu.MemorySpace.VMEM),
    )(x_patches, w_conv, shift, w_ih_f, w_ih_r, w_hh_f, b_f, b_r, fc_w, fc_b)
    return out


# ------------------------- pure-JAX reference -------------------------

def reference_forward(x, p):
    if x.ndim == 4 and x.shape[1] == 1:
        x = x[:, 0]
    if x.shape[1] != C_IN:
        x = jnp.transpose(x, (0, 2, 1))
    y = lax.conv_general_dilated(x, p["conv_w"], window_strides=(1,), padding=((2, 2),),
                                 dimension_numbers=("NCH", "OIH", "NCH"))
    y = y + p["conv_b"][None, :, None]
    inv = 1.0 / jnp.sqrt(p["bn_var"] + BN_EPS)
    y = ((y - p["bn_mean"][None, :, None]) * inv[None, :, None]
         * p["bn_gamma"][None, :, None] + p["bn_beta"][None, :, None])
    y = jnp.maximum(y, 0.0)
    B, Cc, T = y.shape
    y = jnp.max(y.reshape(B, Cc, T // 2, 2), axis=3)         # MaxPool1d(2)
    seq = jnp.transpose(y, (0, 2, 1))                        # (B, L, 64)

    def run_lstm(seq_dir, w_ih, w_hh, b_ih, b_hh):
        Bq = seq_dir.shape[0]

        def cell(carry, x_t):
            h, c = carry
            gates = x_t @ w_ih.T + h @ w_hh.T + b_ih + b_hh
            i = jax.nn.sigmoid(gates[:, :H])
            f = jax.nn.sigmoid(gates[:, H:2 * H])
            g = jnp.tanh(gates[:, 2 * H:3 * H])
            o = jax.nn.sigmoid(gates[:, 3 * H:4 * H])
            c = f * c + i * g
            h = o * jnp.tanh(c)
            return (h, c), h

        init = (jnp.zeros((Bq, H), jnp.float32), jnp.zeros((Bq, H), jnp.float32))
        _, hs = lax.scan(cell, init, jnp.transpose(seq_dir, (1, 0, 2)))
        return jnp.transpose(hs, (1, 0, 2))                  # (B, L, H)

    fwd = run_lstm(seq, p["w_ih_f"], p["w_hh_f"], p["b_ih_f"], p["b_hh_f"])
    bwd = run_lstm(seq[:, ::-1, :], p["w_ih_r"], p["w_hh_r"], p["b_ih_r"], p["b_hh_r"])[:, ::-1, :]
    lstm_out = jnp.concatenate([fwd, bwd], axis=-1)
    last = lstm_out[:, -1, :]
    return last @ p["fc_w"].T + p["fc_b"]


# ------------------------- deterministic params -------------------------

def init_params(key):
    ks = list(jax.random.split(key, 16))
    n = lambda k, shape, s: (s * jax.random.normal(k, shape)).astype(jnp.float32)
    p = {}
    p["conv_w"] = n(ks[0], (C_OUT, C_IN, K), 0.2)
    p["conv_b"] = n(ks[1], (C_OUT,), 0.1)
    p["bn_gamma"] = 1.0 + n(ks[2], (C_OUT,), 0.1)
    p["bn_beta"] = n(ks[3], (C_OUT,), 0.1)
    p["bn_mean"] = n(ks[4], (C_OUT,), 0.1)
    p["bn_var"] = 0.5 + jax.random.uniform(ks[5], (C_OUT,), jnp.float32)
    p["w_ih_f"] = n(ks[6], (4 * H, C_OUT), 0.1)
    p["w_hh_f"] = n(ks[7], (4 * H, H), 0.1)
    p["b_ih_f"] = n(ks[8], (4 * H,), 0.05)
    p["b_hh_f"] = n(ks[9], (4 * H,), 0.05)
    p["w_ih_r"] = n(ks[10], (4 * H, C_OUT), 0.1)
    p["w_hh_r"] = n(ks[11], (4 * H, H), 0.1)
    p["b_ih_r"] = n(ks[12], (4 * H,), 0.05)
    p["b_hh_r"] = n(ks[13], (4 * H,), 0.05)
    p["fc_w"] = n(ks[14], (1, 2 * H), 0.1)
    p["fc_b"] = n(ks[15], (1,), 0.1)
    return p


if __name__ == "__main__":
    key = jax.random.PRNGKey(0)
    pkey, xkey = jax.random.split(key)
    params = init_params(pkey)
    x = jax.random.normal(xkey, (2, C_IN, T_IN), jnp.float32)   # (B, C, T) like PyTorch

    out = jax.jit(pallas_forward)(x, params)
    out = jax.block_until_ready(out)
    ref = jax.block_until_ready(reference_forward(x, params))

    assert out.shape == (2, 1), out.shape
    assert bool(jnp.all(jnp.isfinite(out)))
    np.testing.assert_allclose(np.asarray(out), np.asarray(ref), atol=1e-2, rtol=1e-2)
    print("KERNEL_OK")
</pallas_src>

<mosaic_0001>
module attributes {stable_mosaic.version = 11 : i64} {
  func.func @fused_cnn_bilstm_kernel(%arg0: memref<32x32xf32, #tpu.memory_space<vmem>>, %arg1: memref<32x64xf32, #tpu.memory_space<vmem>>, %arg2: memref<1x64xf32, #tpu.memory_space<vmem>>, %arg3: memref<64x128xf32, #tpu.memory_space<vmem>>, %arg4: memref<64x128xf32, #tpu.memory_space<vmem>>, %arg5: memref<32x128xf32, #tpu.memory_space<vmem>>, %arg6: memref<1x128xf32, #tpu.memory_space<vmem>>, %arg7: memref<1x128xf32, #tpu.memory_space<vmem>>, %arg8: memref<1x64xf32, #tpu.memory_space<vmem>>, %arg9: memref<1x1xf32, #tpu.memory_space<vmem>>, %arg10: memref<2x1xf32, #tpu.memory_space<vmem>>) attributes {dimension_semantics = [], scalar_prefetch = 0 : i64, scratch_operands = 0 : i64, tpu.core_type = #tpu.core_type<tc>} {
    %c0 = arith.constant 0 : index
    %c0_0 = arith.constant 0 : index
    %0 = vector.load %arg0[%c0, %c0_0] : memref<32x32xf32, #tpu.memory_space<vmem>>, vector<32x32xf32>
    %c0_1 = arith.constant 0 : index
    %c0_2 = arith.constant 0 : index
    %1 = vector.load %arg1[%c0_1, %c0_2] : memref<32x64xf32, #tpu.memory_space<vmem>>, vector<32x64xf32>
    %cst = arith.constant dense<0.000000e+00> : vector<32x64xf32>
    %2 = tpu.matmul %0, %1, %cst {dimension_numbers = #tpu.dot_dimension_numbers<[1], [0], [0], [1], [0, 0, 1, 1], [], []>} : vector<32x32xf32>, vector<32x64xf32>, vector<32x64xf32> -> vector<32x64xf32>
    %c0_3 = arith.constant 0 : index
    %c0_4 = arith.constant 0 : index
    %3 = vector.load %arg2[%c0_3, %c0_4] : memref<1x64xf32, #tpu.memory_space<vmem>>, vector<1x64xf32>
    %4 = vector.broadcast %3 : vector<1x64xf32> to vector<32x64xf32>
    %5 = arith.addf %2, %4 : vector<32x64xf32>
    %cst_5 = arith.constant 0.000000e+00 : f32
    %6 = vector.broadcast %cst_5 : f32 to vector<32x64xf32>
    %7 = arith.maximumf %5, %6 : vector<32x64xf32>
    %8 = vector.shape_cast %7 : vector<32x64xf32> to vector<16x2x64xf32>
    %9 = vector.extract_strided_slice %8 {offsets = [0, 0, 0], sizes = [16, 1, 64], strides = [1, 1, 1]} : vector<16x2x64xf32> to vector<16x1x64xf32>
    %10 = vector.shape_cast %9 : vector<16x1x64xf32> to vector<16x64xf32>
    %11 = vector.extract_strided_slice %8 {offsets = [0, 1, 0], sizes = [16, 1, 64], strides = [1, 1, 1]} : vector<16x2x64xf32> to vector<16x1x64xf32>
    %12 = vector.shape_cast %11 : vector<16x1x64xf32> to vector<16x64xf32>
    %13 = arith.maximumf %10, %12 : vector<16x64xf32>
    %c0_6 = arith.constant 0 : index
    %c0_7 = arith.constant 0 : index
    %14 = vector.load %arg3[%c0_6, %c0_7] : memref<64x128xf32, #tpu.memory_space<vmem>>, vector<64x128xf32>
    %cst_8 = arith.constant dense<0.000000e+00> : vector<16x128xf32>
    %15 = tpu.matmul %13, %14, %cst_8 {dimension_numbers = #tpu.dot_dimension_numbers<[1], [0], [0], [1], [0, 0, 1, 1], [], []>} : vector<16x64xf32>, vector<64x128xf32>, vector<16x128xf32> -> vector<16x128xf32>
    %c0_9 = arith.constant 0 : index
    %c0_10 = arith.constant 0 : index
    %16 = vector.load %arg6[%c0_9, %c0_10] : memref<1x128xf32, #tpu.memory_space<vmem>>, vector<1x128xf32>
    %17 = vector.broadcast %16 : vector<1x128xf32> to vector<16x128xf32>
    %18 = arith.addf %15, %17 : vector<16x128xf32>
    %c0_11 = arith.constant 0 : index
    %c0_12 = arith.constant 0 : index
    %19 = vector.load %arg5[%c0_11, %c0_12] : memref<32x128xf32, #tpu.memory_space<vmem>>, vector<32x128xf32>
    %20 = tpu.iota {dimensions = array<i32: 1>} : vector<2x128xi32>
    %c64_i32 = arith.constant 64 : i32
    %21 = vector.broadcast %c64_i32 : i32 to vector<2x128xi32>
    %22 = arith.cmpi sge, %20, %21 : vector<2x128xi32>
    %c96_i32 = arith.constant 96 : i32
    %23 = vector.broadcast %c96_i32 : i32 to vector<2x128xi32>
    %24 = arith.cmpi slt, %20, %23 : vector<2x128xi32>
    %25 = arith.andi %22, %24 : vector<2x128xi1>
    %cst_13 = arith.constant 0.000000e+00 : f32
    %26 = vector.broadcast %cst_13 : f32 to vector<2x32xf32>
    %cst_14 = arith.constant 0.000000e+00 : f32
    %27 = vector.broadcast %cst_14 : f32 to vector<2x32xf32>
    %28 = vector.extract_strided_slice %18 {offsets = [0, 0], sizes = [2, 128], strides = [1, 1]} : vector<16x128xf32> to vector<2x128xf32>
    %cst_15 = arith.constant dense<0.000000e+00> : vector<2x128xf32>
    %29 = tpu.matmul %26, %19, %cst_15 {dimension_numbers = #tpu.dot_dimension_numbers<[1], [0], [0], [1], [0, 0, 1, 1], [], []>} : vector<2x32xf32>, vector<32x128xf32>, vector<2x128xf32> -> vector<2x128xf32>
    %30 = arith.addf %28, %29 : vector<2x128xf32>
    %31 = math.tanh %30 : vector<2x128xf32>
    %32 = arith.negf %30 : vector<2x128xf32>
    %33 = math.exp %32 : vector<2x128xf32>
    %cst_16 = arith.constant 1.000000e+00 : f32
    %34 = vector.broadcast %cst_16 : f32 to vector<2x128xf32>
    %35 = arith.addf %34, %33 : vector<2x128xf32>
    %36 = arith.divf %34, %35 : vector<2x128xf32>
    %37 = arith.select %25, %31, %36 : vector<2x128xi1>, vector<2x128xf32>
    %38 = vector.extract_strided_slice %37 {offsets = [0, 0], sizes = [2, 32], strides = [1, 1]} : vector<2x128xf32> to vector<2x32xf32>
    %39 = vector.extract_strided_slice %37 {offsets = [0, 32], sizes = [2, 32], strides = [1, 1]} : vector<2x128xf32> to vector<2x32xf32>
    %40 = vector.extract_strided_slice %37 {offsets = [0, 64], sizes = [2, 32], strides = [1, 1]} : vector<2x128xf32> to vector<2x32xf32>
    %41 = vector.extract_strided_slice %37 {offsets = [0, 96], sizes = [2, 32], strides = [1, 1]} : vector<2x128xf32> to vector<2x32xf32>
    %42 = arith.mulf %39, %27 : vector<2x32xf32>
    %43 = arith.mulf %38, %40 : vector<2x32xf32>
    %44 = arith.addf %42, %43 : vector<2x32xf32>
    %45 = math.tanh %44 : vector<2x32xf32>
    %46 = arith.mulf %41, %45 : vector<2x32xf32>
    %47 = vector.extract_strided_slice %18 {offsets = [2, 0], sizes = [2, 128], strides = [1, 1]} : vector<16x128xf32> to vector<2x128xf32>
    %cst_17 = arith.constant dense<0.000000e+00> : vector<2x128xf32>
    %48 = tpu.matmul %46, %19, %cst_17 {dimension_numbers = #tpu.dot_dimension_numbers<[1], [0], [0], [1], [0, 0, 1, 1], [], []>} : vector<2x32xf32>, vector<32x128xf32>, vector<2x128xf32> -> vector<2x128xf32>
    %49 = arith.addf %47, %48 : vector<2x128xf32>
    %50 = math.tanh %49 : vector<2x128xf32>
    %51 = arith.negf %49 : vector<2x128xf32>
    %52 = math.exp %51 : vector<2x128xf32>
    %cst_18 = arith.constant 1.000000e+00 : f32
    %53 = vector.broadcast %cst_18 : f32 to vector<2x128xf32>
    %54 = arith.addf %53, %52 : vector<2x128xf32>
    %55 = arith.divf %53, %54 : vector<2x128xf32>
    %56 = arith.select %25, %50, %55 : vector<2x128xi1>, vector<2x128xf32>
    %57 = vector.extract_strided_slice %56 {offsets = [0, 0], sizes = [2, 32], strides = [1, 1]} : vector<2x128xf32> to vector<2x32xf32>
    %58 = vector.extract_strided_slice %56 {offsets = [0, 32], sizes = [2, 32], strides = [1, 1]} : vector<2x128xf32> to vector<2x32xf32>
    %59 = vector.extract_strided_slice %56 {offsets = [0, 64], sizes = [2, 32], strides = [1, 1]} : vector<2x128xf32> to vector<2x32xf32>
    %60 = vector.extract_strided_slice %56 {offsets = [0, 96], sizes = [2, 32], strides = [1, 1]} : vector<2x128xf32> to vector<2x32xf32>
    %61 = arith.mulf %58, %44 : vector<2x32xf32>
    %62 = arith.mulf %57, %59 : vector<2x32xf32>
    %63 = arith.addf %61, %62 : vector<2x32xf32>
    %64 = math.tanh %63 : vector<2x32xf32>
    %65 = arith.mulf %60, %64 : vector<2x32xf32>
    %66 = vector.extract_strided_slice %18 {offsets = [4, 0], sizes = [2, 128], strides = [1, 1]} : vector<16x128xf32> to vector<2x128xf32>
    %cst_19 = arith.constant dense<0.000000e+00> : vector<2x128xf32>
    %67 = tpu.matmul %65, %19, %cst_19 {dimension_numbers = #tpu.dot_dimension_numbers<[1], [0], [0], [1], [0, 0, 1, 1], [], []>} : vector<2x32xf32>, vector<32x128xf32>, vector<2x128xf32> -> vector<2x128xf32>
    %68 = arith.addf %66, %67 : vector<2x128xf32>
    %69 = math.tanh %68 : vector<2x128xf32>
    %70 = arith.negf %68 : vector<2x128xf32>
    %71 = math.exp %70 : vector<2x128xf32>
    %cst_20 = arith.constant 1.000000e+00 : f32
    %72 = vector.broadcast %cst_20 : f32 to vector<2x128xf32>
    %73 = arith.addf %72, %71 : vector<2x128xf32>
    %74 = arith.divf %72, %73 : vector<2x128xf32>
    %75 = arith.select %25, %69, %74 : vector<2x128xi1>, vector<2x128xf32>
    %76 = vector.extract_strided_slice %75 {offsets = [0, 0], sizes = [2, 32], strides = [1, 1]} : vector<2x128xf32> to vector<2x32xf32>
    %77 = vector.extract_strided_slice %75 {offsets = [0, 32], sizes = [2, 32], strides = [1, 1]} : vector<2x128xf32> to vector<2x32xf32>
    %78 = vector.extract_strided_slice %75 {offsets = [0, 64], sizes = [2, 32], strides = [1, 1]} : vector<2x128xf32> to vector<2x32xf32>
    %79 = vector.extract_strided_slice %75 {offsets = [0, 96], sizes = [2, 32], strides = [1, 1]} : vector<2x128xf32> to vector<2x32xf32>
    %80 = arith.mulf %77, %63 : vector<2x32xf32>
    %81 = arith.mulf %76, %78 : vector<2x32xf32>
    %82 = arith.addf %80, %81 : vector<2x32xf32>
    %83 = math.tanh %82 : vector<2x32xf32>
    %84 = arith.mulf %79, %83 : vector<2x32xf32>
    %85 = vector.extract_strided_slice %18 {offsets = [6, 0], sizes = [2, 128], strides = [1, 1]} : vector<16x128xf32> to vector<2x128xf32>
    %cst_21 = arith.constant dense<0.000000e+00> : vector<2x128xf32>
    %86 = tpu.matmul %84, %19, %cst_21 {dimension_numbers = #tpu.dot_dimension_numbers<[1], [0], [0], [1], [0, 0, 1, 1], [], []>} : vector<2x32xf32>, vector<32x128xf32>, vector<2x128xf32> -> vector<2x128xf32>
    %87 = arith.addf %85, %86 : vector<2x128xf32>
    %88 = math.tanh %87 : vector<2x128xf32>
    %89 = arith.negf %87 : vector<2x128xf32>
    %90 = math.exp %89 : vector<2x128xf32>
    %cst_22 = arith.constant 1.000000e+00 : f32
    %91 = vector.broadcast %cst_22 : f32 to vector<2x128xf32>
    %92 = arith.addf %91, %90 : vector<2x128xf32>
    %93 = arith.divf %91, %92 : vector<2x128xf32>
    %94 = arith.select %25, %88, %93 : vector<2x128xi1>, vector<2x128xf32>
    %95 = vector.extract_strided_slice %94 {offsets = [0, 0], sizes = [2, 32], strides = [1, 1]} : vector<2x128xf32> to vector<2x32xf32>
    %96 = vector.extract_strided_slice %94 {offsets = [0, 32], sizes = [2, 32], strides = [1, 1]} : vector<2x128xf32> to vector<2x32xf32>
    %97 = vector.extract_strided_slice %94 {offsets = [0, 64], sizes = [2, 32], strides = [1, 1]} : vector<2x128xf32> to vector<2x32xf32>
    %98 = vector.extract_strided_slice %94 {offsets = [0, 96], sizes = [2, 32], strides = [1, 1]} : vector<2x128xf32> to vector<2x32xf32>
    %99 = arith.mulf %96, %82 : vector<2x32xf32>
    %100 = arith.mulf %95, %97 : vector<2x32xf32>
    %101 = arith.addf %99, %100 : vector<2x32xf32>
    %102 = math.tanh %101 : vector<2x32xf32>
    %103 = arith.mulf %98, %102 : vector<2x32xf32>
    %104 = vector.extract_strided_slice %18 {offsets = [8, 0], sizes = [2, 128], strides = [1, 1]} : vector<16x128xf32> to vector<2x128xf32>
    %cst_23 = arith.constant dense<0.000000e+00> : vector<2x128xf32>
    %105 = tpu.matmul %103, %19, %cst_23 {dimension_numbers = #tpu.dot_dimension_numbers<[1], [0], [0], [1], [0, 0, 1, 1], [], []>} : vector<2x32xf32>, vector<32x128xf32>, vector<2x128xf32> -> vector<2x128xf32>
    %106 = arith.addf %104, %105 : vector<2x128xf32>
    %107 = math.tanh %106 : vector<2x128xf32>
    %108 = arith.negf %106 : vector<2x128xf32>
    %109 = math.exp %108 : vector<2x128xf32>
    %cst_24 = arith.constant 1.000000e+00 : f32
    %110 = vector.broadcast %cst_24 : f32 to vector<2x128xf32>
    %111 = arith.addf %110, %109 : vector<2x128xf32>
    %112 = arith.divf %110, %111 : vector<2x128xf32>
    %113 = arith.select %25, %107, %112 : vector<2x128xi1>, vector<2x128xf32>
    %114 = vector.extract_strided_slice %113 {offsets = [0, 0], sizes = [2, 32], strides = [1, 1]} : vector<2x128xf32> to vector<2x32xf32>
    %115 = vector.extract_strided_slice %113 {offsets = [0, 32], sizes = [2, 32], strides = [1, 1]} : vector<2x128xf32> to vector<2x32xf32>
    %116 = vector.extract_strided_slice %113 {offsets = [0, 64], sizes = [2, 32], strides = [1, 1]} : vector<2x128xf32> to vector<2x32xf32>
    %117 = vector.extract_strided_slice %113 {offsets = [0, 96], sizes = [2, 32], strides = [1, 1]} : vector<2x128xf32> to vector<2x32xf32>
    %118 = arith.mulf %115, %101 : vector<2x32xf32>
    %119 = arith.mulf %114, %116 : vector<2x32xf32>
    %120 = arith.addf %118, %119 : vector<2x32xf32>
    %121 = math.tanh %120 : vector<2x32xf32>
    %122 = arith.mulf %117, %121 : vector<2x32xf32>
    %123 = vector.extract_strided_slice %18 {offsets = [10, 0], sizes = [2, 128], strides = [1, 1]} : vector<16x128xf32> to vector<2x128xf32>
    %cst_25 = arith.constant dense<0.000000e+00> : vector<2x128xf32>
    %124 = tpu.matmul %122, %19, %cst_25 {dimension_numbers = #tpu.dot_dimension_numbers<[1], [0], [0], [1], [0, 0, 1, 1], [], []>} : vector<2x32xf32>, vector<32x128xf32>, vector<2x128xf32> -> vector<2x128xf32>
    %125 = arith.addf %123, %124 : vector<2x128xf32>
    %126 = math.tanh %125 : vector<2x128xf32>
    %127 = arith.negf %125 : vector<2x128xf32>
    %128 = math.exp %127 : vector<2x128xf32>
    %cst_26 = arith.constant 1.000000e+00 : f32
    %129 = vector.broadcast %cst_26 : f32 to vector<2x128xf32>
    %130 = arith.addf %129, %128 : vector<2x128xf32>
    %131 = arith.divf %129, %130 : vector<2x128xf32>
    %132 = arith.select %25, %126, %131 : vector<2x128xi1>, vector<2x128xf32>
    %133 = vector.extract_strided_slice %132 {offsets = [0, 0], sizes = [2, 32], strides = [1, 1]} : vector<2x128xf32> to vector<2x32xf32>
    %134 = vector.extract_strided_slice %132 {offsets = [0, 32], sizes = [2, 32], strides = [1, 1]} : vector<2x128xf32> to vector<2x32xf32>
    %135 = vector.extract_strided_slice %132 {offsets = [0, 64], sizes = [2, 32], strides = [1, 1]} : vector<2x128xf32> to vector<2x32xf32>
    %136 = vector.extract_strided_slice %132 {offsets = [0, 96], sizes = [2, 32], strides = [1, 1]} : vector<2x128xf32> to vector<2x32xf32>
    %137 = arith.mulf %134, %120 : vector<2x32xf32>
    %138 = arith.mulf %133, %135 : vector<2x32xf32>
    %139 = arith.addf %137, %138 : vector<2x32xf32>
    %140 = math.tanh %139 : vector<2x32xf32>
    %141 = arith.mulf %136, %140 : vector<2x32xf32>
    %142 = vector.extract_strided_slice %18 {offsets = [12, 0], sizes = [2, 128], strides = [1, 1]} : vector<16x128xf32> to vector<2x128xf32>
    %cst_27 = arith.constant dense<0.000000e+00> : vector<2x128xf32>
    %143 = tpu.matmul %141, %19, %cst_27 {dimension_numbers = #tpu.dot_dimension_numbers<[1], [0], [0], [1], [0, 0, 1, 1], [], []>} : vector<2x32xf32>, vector<32x128xf32>, vector<2x128xf32> -> vector<2x128xf32>
    %144 = arith.addf %142, %143 : vector<2x128xf32>
    %145 = math.tanh %144 : vector<2x128xf32>
    %146 = arith.negf %144 : vector<2x128xf32>
    %147 = math.exp %146 : vector<2x128xf32>
    %cst_28 = arith.constant 1.000000e+00 : f32
    %148 = vector.broadcast %cst_28 : f32 to vector<2x128xf32>
    %149 = arith.addf %148, %147 : vector<2x128xf32>
    %150 = arith.divf %148, %149 : vector<2x128xf32>
    %151 = arith.select %25, %145, %150 : vector<2x128xi1>, vector<2x128xf32>
    %152 = vector.extract_strided_slice %151 {offsets = [0, 0], sizes = [2, 32], strides = [1, 1]} : vector<2x128xf32> to vector<2x32xf32>
    %153 = vector.extract_strided_slice %151 {offsets = [0, 32], sizes = [2, 32], strides = [1, 1]} : vector<2x128xf32> to vector<2x32xf32>
    %154 = vector.extract_strided_slice %151 {offsets = [0, 64], sizes = [2, 32], strides = [1, 1]} : vector<2x128xf32> to vector<2x32xf32>
    %155 = vector.extract_strided_slice %151 {offsets = [0, 96], sizes = [2, 32], strides = [1, 1]} : vector<2x128xf32> to vector<2x32xf32>
    %156 = arith.mulf %153, %139 : vector<2x32xf32>
    %157 = arith.mulf %152, %154 : vector<2x32xf32>
    %158 = arith.addf %156, %157 : vector<2x32xf32>
    %159 = math.tanh %158 : vector<2x32xf32>
    %160 = arith.mulf %155, %159 : vector<2x32xf32>
    %161 = vector.extract_strided_slice %18 {offsets = [14, 0], sizes = [2, 128], strides = [1, 1]} : vector<16x128xf32> to vector<2x128xf32>
    %cst_29 = arith.constant dense<0.000000e+00> : vector<2x128xf32>
    %162 = tpu.matmul %160, %19, %cst_29 {dimension_numbers = #tpu.dot_dimension_numbers<[1], [0], [0], [1], [0, 0, 1, 1], [], []>} : vector<2x32xf32>, vector<32x128xf32>, vector<2x128xf32> -> vector<2x128xf32>
    %163 = arith.addf %161, %162 : vector<2x128xf32>
    %164 = math.tanh %163 : vector<2x128xf32>
    %165 = arith.negf %163 : vector<2x128xf32>
    %166 = math.exp %165 : vector<2x128xf32>
    %cst_30 = arith.constant 1.000000e+00 : f32
    %167 = vector.broadcast %cst_30 : f32 to vector<2x128xf32>
    %168 = arith.addf %167, %166 : vector<2x128xf32>
    %169 = arith.divf %167, %168 : vector<2x128xf32>
    %170 = arith.select %25, %164, %169 : vector<2x128xi1>, vector<2x128xf32>
    %171 = vector.extract_strided_slice %170 {offsets = [0, 0], sizes = [2, 32], strides = [1, 1]} : vector<2x128xf32> to vector<2x32xf32>
    %172 = vector.extract_strided_slice %170 {offsets = [0, 32], sizes = [2, 32], strides = [1, 1]} : vector<2x128xf32> to vector<2x32xf32>
    %173 = vector.extract_strided_slice %170 {offsets = [0, 64], sizes = [2, 32], strides = [1, 1]} : vector<2x128xf32> to vector<2x32xf32>
    %174 = vector.extract_strided_slice %170 {offsets = [0, 96], sizes = [2, 32], strides = [1, 1]} : vector<2x128xf32> to vector<2x32xf32>
    %175 = arith.mulf %172, %158 : vector<2x32xf32>
    %176 = arith.mulf %171, %173 : vector<2x32xf32>
    %177 = arith.addf %175, %176 : vector<2x32xf32>
    %178 = math.tanh %177 : vector<2x32xf32>
    %179 = arith.mulf %174, %178 : vector<2x32xf32>
    %180 = vector.extract_strided_slice %13 {offsets = [14, 0], sizes = [2, 64], strides = [1, 1]} : vector<16x64xf32> to vector<2x64xf32>
    %c0_31 = arith.constant 0 : index
    %c0_32 = arith.constant 0 : index
    %181 = vector.load %arg4[%c0_31, %c0_32] : memref<64x128xf32, #tpu.memory_space<vmem>>, vector<64x128xf32>
    %cst_33 = arith.constant dense<0.000000e+00> : vector<2x128xf32>
    %182 = tpu.matmul %180, %181, %cst_33 {dimension_numbers = #tpu.dot_dimension_numbers<[1], [0], [0], [1], [0, 0, 1, 1], [], []>} : vector<2x64xf32>, vector<64x128xf32>, vector<2x128xf32> -> vector<2x128xf32>
    %c0_34 = arith.constant 0 : index
    %c0_35 = arith.constant 0 : index
    %183 = vector.load %arg7[%c0_34, %c0_35] : memref<1x128xf32, #tpu.memory_space<vmem>>, vector<1x128xf32>
    %184 = vector.broadcast %183 : vector<1x128xf32> to vector<2x128xf32>
    %185 = arith.addf %182, %184 : vector<2x128xf32>
    %186 = math.tanh %185 : vector<2x128xf32>
    %187 = arith.negf %185 : vector<2x128xf32>
    %188 = math.exp %187 : vector<2x128xf32>
    %cst_36 = arith.constant 1.000000e+00 : f32
    %189 = vector.broadcast %cst_36 : f32 to vector<2x128xf32>
    %190 = arith.addf %189, %188 : vector<2x128xf32>
    %191 = arith.divf %189, %190 : vector<2x128xf32>
    %192 = arith.select %25, %186, %191 : vector<2x128xi1>, vector<2x128xf32>
    %193 = vector.extract_strided_slice %192 {offsets = [0, 0], sizes = [2, 32], strides = [1, 1]} : vector<2x128xf32> to vector<2x32xf32>
    %194 = vector.extract_strided_slice %192 {offsets = [0, 64], sizes = [2, 32], strides = [1, 1]} : vector<2x128xf32> to vector<2x32xf32>
    %195 = vector.extract_strided_slice %192 {offsets = [0, 96], sizes = [2, 32], strides = [1, 1]} : vector<2x128xf32> to vector<2x32xf32>
    %196 = arith.mulf %193, %194 : vector<2x32xf32>
    %197 = math.tanh %196 : vector<2x32xf32>
    %198 = arith.mulf %195, %197 : vector<2x32xf32>
    %199 = tpu.concatenate %179, %198 in 1 : vector<2x32xf32>, vector<2x32xf32> -> vector<2x64xf32>
    %c0_37 = arith.constant 0 : index
    %c0_38 = arith.constant 0 : index
    %200 = vector.load %arg8[%c0_37, %c0_38] : memref<1x64xf32, #tpu.memory_space<vmem>>, vector<1x64xf32>
    %201 = vector.broadcast %200 : vector<1x64xf32> to vector<2x64xf32>
    %202 = arith.mulf %199, %201 : vector<2x64xf32>
    %cst_39 = arith.constant dense<0.000000e+00> : vector<2xf32>
    %203 = vector.multi_reduction <add>, %202, %cst_39 [1] : vector<2x64xf32> to vector<2xf32>
    %204 = vector.shape_cast %203 : vector<2xf32> to vector<2x1xf32>
    %c0_40 = arith.constant 0 : index
    %c0_41 = arith.constant 0 : index
    %205 = vector.load %arg9[%c0_40, %c0_41] : memref<1x1xf32, #tpu.memory_space<vmem>>, vector<1x1xf32>
    %206 = vector.broadcast %205 : vector<1x1xf32> to vector<2x1xf32>
    %207 = arith.addf %204, %206 : vector<2x1xf32>
    %c0_42 = arith.constant 0 : index
    %c0_43 = arith.constant 0 : index
    %208 = vector.load %arg10[%c0_42, %c0_43] : memref<2x1xf32, #tpu.memory_space<vmem>>, vector<2x1xf32>
    tpu.vector_store %arg10[%c0_42, %c0_43], %207 {strides = array<i32>} : memref<2x1xf32, #tpu.memory_space<vmem>>, vector<2x1xf32>,
    return
  }
}

</mosaic_0001>

<llo_original>
// kernel: pallas_forward.1
$region0: #{pallas_forward.1}
  #allocation0 [shape = 'u32[]', space=smem, size = 0x4, offset = 0x4, fixed_abs, tag = 'smem constant byte address 0x4 - core index']
  #allocation1 [shape = 'u32[72,128]{1,0:T(1,128)}', space=vmem, size = 0x9000, scoped, tag = 'internal scratch']
  #allocation2 [shape = 'f32[1,1]{1,0:T(1,128)S(1)}', space=vmem, size = 0x200, scoped, tag = 'scoped memory for pallas_forward.1']
  %s0 = inlined_call_operand.vmem [shape: f32[32,32], index: 0, kind: input, shape index: {}]
  %s1 = inlined_call_operand.vmem [shape: f32[32,64], index: 1, kind: input, shape index: {}]
  %s2 = inlined_call_operand.vmem [shape: f32[1,64], index: 2, kind: input, shape index: {}]
  %s3 = inlined_call_operand.vmem [shape: f32[64,128], index: 3, kind: input, shape index: {}]
  %s4 = inlined_call_operand.vmem [shape: f32[64,128], index: 4, kind: input, shape index: {}]
  %s5 = inlined_call_operand.vmem [shape: f32[32,128], index: 5, kind: input, shape index: {}]
  %s6 = inlined_call_operand.vmem [shape: f32[1,128], index: 6, kind: input, shape index: {}]
  %s7 = inlined_call_operand.vmem [shape: f32[1,128], index: 7, kind: input, shape index: {}]
  %s8 = inlined_call_operand.vmem [shape: f32[1,64], index: 8, kind: input, shape index: {}]
  %s9 = inlined_call_operand.<no memory space> [shape: f32[1,1], index: 9, kind: input, shape index: {}]
  %s10 = inlined_call_operand.vmem [shape: f32[2,1], index: 10, kind: output, shape index: {}]
  %s11 = sld [smem:[#allocation0]]
  $region50: #{pallas_forward.1} parent=0
    _
  %s13 = ssub.s32 1, %s11
  %s14 = scalar_select 0, %s13, %s11
  %v15 = vstv %s9
  %16 = vst [vmem:[#allocation2] sm:$0x1] %v15
  // Predicated region
  $region2: #{pallas_forward.1} parent=0 // pred_check
    _
  $region3: #{pallas_forward.1} parent=0 // pred_check_branch
    %18 = sbr.rel (0) target = $region5
  $region4: #{pallas_forward.1} parent=0 // pred_region
    _
  $region5: #{pallas_forward.1} parent=0 // pred_fallthru
    _
  // Predicated region
  $region6: #{pallas_forward.1} parent=0 // pred_check
    _
  $region7: #{pallas_forward.1} parent=0 // pred_check_branch
    %20 = sbr.rel (0) target = $region9
  $region8: #{pallas_forward.1} parent=0 // pred_region
    _
  $region9: #{pallas_forward.1} parent=0 // pred_fallthru
    _
  // Predicated region
  $region10: #{pallas_forward.1} parent=0 // pred_check
    _
  $region11: #{pallas_forward.1} parent=0 // pred_check_branch
    %22 = sbr.rel (0) target = $region13
  $region12: #{pallas_forward.1} parent=0 // pred_region
    _
  $region13: #{pallas_forward.1} parent=0 // pred_fallthru
    _
  // Predicated region
  $region14: #{pallas_forward.1} parent=0 // pred_check
    _
  $region15: #{pallas_forward.1} parent=0 // pred_check_branch
    %24 = sbr.rel (0) target = $region17
  $region16: #{pallas_forward.1} parent=0 // pred_region
    _
  $region17: #{pallas_forward.1} parent=0 // pred_fallthru
    _
  // Predicated region
  $region18: #{pallas_forward.1} parent=0 // pred_check
    _
  $region19: #{pallas_forward.1} parent=0 // pred_check_branch
    %26 = sbr.rel (0) target = $region21
  $region20: #{pallas_forward.1} parent=0 // pred_region
    _
  $region21: #{pallas_forward.1} parent=0 // pred_fallthru
    _
  // Predicated region
  $region22: #{pallas_forward.1} parent=0 // pred_check
    _
  $region23: #{pallas_forward.1} parent=0 // pred_check_branch
    %28 = sbr.rel (0) target = $region25
  $region24: #{pallas_forward.1} parent=0 // pred_region
    _
  $region25: #{pallas_forward.1} parent=0 // pred_fallthru
    _
  // Predicated region
  $region26: #{pallas_forward.1} parent=0 // pred_check
    _
  $region27: #{pallas_forward.1} parent=0 // pred_check_branch
    %30 = sbr.rel (0) target = $region29
  $region28: #{pallas_forward.1} parent=0 // pred_region
    _
  $region29: #{pallas_forward.1} parent=0 // pred_fallthru
    _
  // Predicated region
  $region30: #{pallas_forward.1} parent=0 // pred_check
    _
  $region31: #{pallas_forward.1} parent=0 // pred_check_branch
    %32 = sbr.rel (0) target = $region33
  $region32: #{pallas_forward.1} parent=0 // pred_region
    _
  $region33: #{pallas_forward.1} parent=0 // pred_fallthru
    _
  // Predicated region
  $region34: #{pallas_forward.1} parent=0 // pred_check
    _
  $region35: #{pallas_forward.1} parent=0 // pred_check_branch
    %34 = sbr.rel (0) target = $region37
  $region36: #{pallas_forward.1} parent=0 // pred_region
    _
  $region37: #{pallas_forward.1} parent=0 // pred_fallthru
    _
  // Predicated region
  $region38: #{pallas_forward.1} parent=0 // pred_check
    _
  $region39: #{pallas_forward.1} parent=0 // pred_check_branch
    %36 = sbr.rel (0) target = $region41
  $region40: #{pallas_forward.1} parent=0 // pred_region
    _
  $region41: #{pallas_forward.1} parent=0 // pred_fallthru
    _
  %v37 = vld [vmem:[%s0] sm:$0xff]
  %v38 = vld [vmem:[%s0 + $0x8] sm:$0xff]
  %v39 = vld [vmem:[%s0 + $0x10] sm:$0xff]
  %v40 = vld [vmem:[%s0 + $0x18] sm:$0xff]
  %v41 = vld [vmem:[%s1] sm:$0xff]
  %v42 = vld [vmem:[%s1 + $0x8] sm:$0xff]
  %v43 = vld [vmem:[%s1 + $0x10] sm:$0xff]
  %v44 = vld [vmem:[%s1 + $0x18] sm:$0xff]
  %v45 = vld [vmem:[%s2] sm:$0x1]
  %v47 = vperm.slane %v45, 0
  %vm49 = vcmask 261120
  %v51 = vsel %vm49, %v37, 0
  %v54 = vsel %vm49, %v38, 0
  %v57 = vsel %vm49, %v39, 0
  %v60 = vsel %vm49, %v40, 0
  %62 = vmatpush.msra.mxu0 0.0
  %63 = vmatpush.msra.mxu0 0.0
  %64 = vmatpush.msra.mxu0 0.0
  %65 = vmatpush.msra.mxu0 0.0
  %66 = vmatpush.msra.mxu0 0.0
  %67 = vmatpush.msra.mxu0 0.0
  %68 = vmatpush.msra.mxu0 0.0
  %69 = vmatpush.msra.mxu0 0.0
  %70 = vmatpush.msra.mxu0 0.0
  %71 = vmatpush.msra.mxu0 0.0
  %72 = vmatpush.msra.mxu0 0.0
  %73 = vmatpush.msra.mxu0 0.0
  %74 = vmatpush.msra.mxu0 %v44
  %75 = vmatpush.msra.mxu0 %v43
  %76 = vmatpush.msra.mxu0 %v42
  %77 = vmatpush.msra.mxu0 %v41
  %78 = vmatmul.f32.gmra.mxu0 %v51
  %v79 = vpop.f32.mrf.mxu0
  %v80 = vadd.f32 %v47, %v79
  %81 = vmatmul.f32.gmra.mxu0 %v54
  %v82 = vpop.f32.mrf.mxu0
  %v83 = vadd.f32 %v47, %v82
  %84 = vmatmul.f32.gmra.mxu0 %v57
  %v85 = vpop.f32.mrf.mxu0
  %v86 = vadd.f32 %v47, %v85
  %87 = vmatmul.f32.gmra.mxu0 %v60
  %v88 = vpop.f32.mrf.mxu0
  %v89 = vadd.f32 %v47, %v88
  %90 = vdwg.mxu0
  %v91 = vmax.f32 %v80, 0.0
  %v92 = vmax.f32 %v83, 0.0
  %v93 = vmax.f32 %v86, 0.0
  %v94 = vmax.f32 %v89, 0.0
  %v99 = vrot.slane %v91, 2
  %v100 = vrot.slane %v91, 4
  %v101 = vrot.slane %v91, 6
  %v102 = vrot.slane %v92, 2
  %v103 = vrot.slane %v92, 4
  %v104 = vrot.slane %v92, 6
  %v105 = vrot.slane %v93, 2
  %v106 = vrot.slane %v93, 4
  %v107 = vrot.slane %v93, 6
  %v108 = vrot.slane %v94, 2
  %v109 = vrot.slane %v94, 4
  %v110 = vrot.slane %v94, 6
  %v123 = vrot.slane %v91, 7
  %v124 = vrot.slane %v123, 2
  %v125 = vrot.slane %v99, 7
  %v126 = vrot.slane %v125, 2
  %v127 = vrot.slane %v100, 7
  %v128 = vrot.slane %v127, 2
  %v129 = vrot.slane %v101, 7
  %v130 = vrot.slane %v129, 2
  %v131 = vrot.slane %v92, 7
  %v132 = vrot.slane %v131, 2
  %v133 = vrot.slane %v102, 7
  %v134 = vrot.slane %v133, 2
  %v135 = vrot.slane %v103, 7
  %v136 = vrot.slane %v135, 2
  %v137 = vrot.slane %v104, 7
  %v138 = vrot.slane %v137, 2
  %v139 = vrot.slane %v93, 7
  %v140 = vrot.slane %v139, 2
  %v141 = vrot.slane %v105, 7
  %v142 = vrot.slane %v141, 2
  %v143 = vrot.slane %v106, 7
  %v144 = vrot.slane %v143, 2
  %v145 = vrot.slane %v107, 7
  %v146 = vrot.slane %v145, 2
  %v147 = vrot.slane %v94, 7
  %v148 = vrot.slane %v147, 2
  %v149 = vrot.slane %v108, 7
  %v150 = vrot.slane %v149, 2
  %v151 = vrot.slane %v109, 7
  %v152 = vrot.slane %v151, 2
  %v153 = vrot.slane %v110, 7
  %v154 = vrot.slane %v153, 2
  %v171 = vmax.f32 %v91, %v124
  %v172 = vmax.f32 %v99, %v126
  %v173 = vmax.f32 %v100, %v128
  %v174 = vmax.f32 %v101, %v130
  %v175 = vmax.f32 %v92, %v132
  %v176 = vmax.f32 %v102, %v134
  %v177 = vmax.f32 %v103, %v136
  %v178 = vmax.f32 %v104, %v138
  %v179 = vmax.f32 %v93, %v140
  %v180 = vmax.f32 %v105, %v142
  %v181 = vmax.f32 %v106, %v144
  %v182 = vmax.f32 %v107, %v146
  %v183 = vmax.f32 %v94, %v148
  %v184 = vmax.f32 %v108, %v150
  %v185 = vmax.f32 %v109, %v152
  %v186 = vmax.f32 %v110, %v154
  %v187 = vld [vmem:[%s3] sm:$0xff]
  %v188 = vld [vmem:[%s3 + $0x8] sm:$0xff]
  %v189 = vld [vmem:[%s3 + $0x10] sm:$0xff]
  %v190 = vld [vmem:[%s3 + $0x18] sm:$0xff]
  %v191 = vld [vmem:[%s3 + $0x20] sm:$0xff]
  %v192 = vld [vmem:[%s3 + $0x28] sm:$0xff]
  %v193 = vld [vmem:[%s3 + $0x30] sm:$0xff]
  %v194 = vld [vmem:[%s3 + $0x38] sm:$0xff]
  %v195 = vld [vmem:[%s6] sm:$0x1]
  %v197 = vperm.slane %v195, 0
  %v215 = vperm.slane %v171, 0
  %v216 = vperm.slane %v172, 0
  %v217 = vperm.slane %v173, 0
  %v218 = vperm.slane %v174, 0
  %v219 = vperm.slane %v175, 0
  %v220 = vperm.slane %v176, 0
  %v221 = vperm.slane %v177, 0
  %v222 = vperm.slane %v178, 0
  %v223 = vperm.slane %v179, 0
  %v224 = vperm.slane %v180, 0
  %v225 = vperm.slane %v181, 0
  %v226 = vperm.slane %v182, 0
  %v227 = vperm.slane %v183, 0
  %v228 = vperm.slane %v184, 0
  %v229 = vperm.slane %v185, 0
  %v230 = vperm.slane %v186, 0
  %vm231 = vcmask 1041409
  %v232 = vsel %vm231, %v216, %v215
  %vm233 = vcmask 1042434
  %v234 = vsel %vm233, %v217, %v232
  %vm235 = vcmask 1043459
  %v236 = vsel %vm235, %v218, %v234
  %vm237 = vcmask 1044484
  %v238 = vsel %vm237, %v219, %v236
  %vm239 = vcmask 1045509
  %v240 = vsel %vm239, %v220, %v238
  %vm241 = vcmask 1046534
  %v242 = vsel %vm241, %v221, %v240
  %vm243 = vcmask 1047559
  %v244 = vsel %vm243, %v222, %v242
  %v245 = vsel %vm231, %v224, %v223
  %v246 = vsel %vm233, %v225, %v245
  %v247 = vsel %vm235, %v226, %v246
  %v248 = vsel %vm237, %v227, %v247
  %v249 = vsel %vm239, %v228, %v248
  %v250 = vsel %vm241, %v229, %v249
  %v251 = vsel %vm243, %v230, %v250
  %vm252 = vcmask 523264
  %v253 = vsel %vm252, %v244, 0
  %v255 = vsel %vm252, %v251, 0
  %257 = vmatpush.msra.mxu0 0.0
  %258 = vmatpush.msra.mxu0 0.0
  %259 = vmatpush.msra.mxu0 0.0
  %260 = vmatpush.msra.mxu0 0.0
  %261 = vmatpush.msra.mxu0 0.0
  %262 = vmatpush.msra.mxu0 0.0
  %263 = vmatpush.msra.mxu0 0.0
  %264 = vmatpush.msra.mxu0 0.0
  %265 = vmatpush.msra.mxu0 %v194
  %266 = vmatpush.msra.mxu0 %v193
  %267 = vmatpush.msra.mxu0 %v192
  %268 = vmatpush.msra.mxu0 %v191
  %269 = vmatpush.msra.mxu0 %v190
  %270 = vmatpush.msra.mxu0 %v189
  %271 = vmatpush.msra.mxu0 %v188
  %272 = vmatpush.msra.mxu0 %v187
  %273 = vmatmul.f32.gmra.mxu0 %v253
  %v274 = vpop.f32.mrf.mxu0
  %v275 = vadd.f32 %v197, %v274
  %276 = vmatmul.f32.gmra.mxu0 %v255
  %v277 = vpop.f32.mrf.mxu0
  %v278 = vadd.f32 %v197, %v277
  %279 = vdwg.mxu0
  %v280 = vld [vmem:[%s5] sm:$0xff]
  %v281 = vld [vmem:[%s5 + $0x8] sm:$0xff]
  %v282 = vld [vmem:[%s5 + $0x10] sm:$0xff]
  %v283 = vld [vmem:[%s5 + $0x18] sm:$0xff]
  %v284 = vlaneseq
  %v285 = vand.u32 %v284, 127
  %vm286 = vcmp.ge.s32.totalorder %v285, 64
  %vm287 = vcmp.lt.s32.totalorder %v285, 96
  %vm288 = vmand %vm286, %vm287
  %v290 = vsel %vm49, 0.0, 0
  %292 = vmatpush.msra.mxu0 0.0
  %293 = vmatpush.msra.mxu0 0.0
  %294 = vmatpush.msra.mxu0 0.0
  %295 = vmatpush.msra.mxu0 0.0
  %296 = vmatpush.msra.mxu0 0.0
  %297 = vmatpush.msra.mxu0 0.0
  %298 = vmatpush.msra.mxu0 0.0
  %299 = vmatpush.msra.mxu0 0.0
  %300 = vmatpush.msra.mxu0 0.0
  %301 = vmatpush.msra.mxu0 0.0
  %302 = vmatpush.msra.mxu0 0.0
  %303 = vmatpush.msra.mxu0 0.0
  %304 = vmatpush.msra.mxu0 %v283
  %305 = vmatpush.msra.mxu0 %v282
  %306 = vmatpush.msra.mxu0 %v281
  %307 = vmatpush.msra.mxu0 %v280
  %308 = vmatmul.f32.gmra.mxu0 %v290
  %v309 = vpop.f32.mrf.mxu0
  %v310 = vadd.f32 0.0, %v309
  %311 = vdwg.mxu0
  %v312 = vadd.f32 %v275, %v310
  %v313 = vtanh.pop %v312
  %v314 = vxor.u32 %v312, 2147483648
  %v315 = vmul.f32 %v314, 1.442695
  %v316 = vpow.pop %v315
  %v317 = vadd.f32 %v316, 1.0
  %v318 = vrcp.pop %v317
  %v319 = vmul.f32 %v317, %v318
  %v320 = vsub.f32 1.0, %v319
  %v321 = vmul.f32 %v318, %v320
  %v322 = vadd.f32 %v318, %v321
  %vm323 = vweird.f32 %v317
  %vm324 = vweird.f32 %v318
  %vm325 = vmor %vm323, %vm324
  %v326 = vsel %vm325, %v318, %v322
  %v327 = vand.u32 2147483647, %v317
  %vm328 = vcmp.eq.f32.partialorder %v327, 8.507059e+37
  %v329 = vand.u32 %v317, 2147483648
  %v330 = vor.u32 1.1754944e-38, %v329
  %v331 = vsel %vm328, %v330, %v326
  %v332 = vmul.f32 1.0, %v331
  %v333 = vsel %vm288, %v313, %v332
  %v334 = vmul.f32 %v333, 0.0
  %336 = vrot.lane.b32.xlu0 %v333, 64
  %v337 = vpop.permute.xlu0 %336
  %v339 = vmul.f32 %v333, %v337
  %341 = vrot.lane.b32.xlu0 %v339, 32
  %v342 = vpop.permute.xlu0 %341
  %v344 = vadd.f32 %v334, %v342
  %v345 = vtanh.pop %v344
  %347 = vrot.lane.b32.xlu0 %v345, 64
  %v348 = vpop.permute.xlu0 %347
  %v350 = vmul.f32 %v333, %v348
  %352 = vrot.lane.b32.xlu0 %v350, 32
  %v353 = vpop.permute.xlu0 %352
  %v354 = vsel %vm49, %v353, 0
  %356 = vmatpush.msra.mxu0 0.0
  %357 = vmatpush.msra.mxu0 0.0
  %358 = vmatpush.msra.mxu0 0.0
  %359 = vmatpush.msra.mxu0 0.0
  %360 = vmatpush.msra.mxu0 0.0
  %361 = vmatpush.msra.mxu0 0.0
  %362 = vmatpush.msra.mxu0 0.0
  %363 = vmatpush.msra.mxu0 0.0
  %364 = vmatpush.msra.mxu0 0.0
  %365 = vmatpush.msra.mxu0 0.0
  %366 = vmatpush.msra.mxu0 0.0
  %367 = vmatpush.msra.mxu0 0.0
  %368 = vmatpush.msra.mxu0 %v283
  %369 = vmatpush.msra.mxu0 %v282
  %370 = vmatpush.msra.mxu0 %v281
  %371 = vmatpush.msra.mxu0 %v280
  %372 = vmatmul.f32.gmra.mxu0 %v354
  %v373 = vpop.f32.mrf.mxu0
  %v374 = vadd.f32 0.0, %v373
  %375 = vdwg.mxu0
  %v377 = vrot.slane %v374, 6
  %v379 = vadd.f32 %v275, %v377
  %v380 = vtanh.pop %v379
  %v381 = vxor.u32 %v379, 2147483648
  %v382 = vmul.f32 %v381, 1.442695
  %v383 = vpow.pop %v382
  %v384 = vadd.f32 %v383, 1.0
  %v385 = vrcp.pop %v384
  %v386 = vmul.f32 %v384, %v385
  %v387 = vsub.f32 1.0, %v386
  %v388 = vmul.f32 %v385, %v387
  %v389 = vadd.f32 %v385, %v388
  %vm390 = vweird.f32 %v384
  %vm391 = vweird.f32 %v385
  %vm392 = vmor %vm390, %vm391
  %v393 = vsel %vm392, %v385, %v389
  %v394 = vand.u32 2147483647, %v384
  %vm395 = vcmp.eq.f32.partialorder %v394, 8.507059e+37
  %v396 = vand.u32 %v384, 2147483648
  %v397 = vor.u32 1.1754944e-38, %v396
  %v398 = vsel %vm395, %v397, %v393
  %v399 = vmul.f32 1.0, %v398
  %v400 = vsel %vm288, %v380, %v399
  %v402 = vrot.slane %v344, 6
  %v404 = vmul.f32 %v400, %v402
  %406 = vrot.lane.b32.xlu0 %v400, 64
  %v407 = vpop.permute.xlu0 %406
  %v409 = vmul.f32 %v400, %v407
  %411 = vrot.lane.b32.xlu0 %v409, 32
  %v412 = vpop.permute.xlu0 %411
  %v414 = vadd.f32 %v404, %v412
  %v415 = vtanh.pop %v414
  %417 = vrot.lane.b32.xlu0 %v415, 64
  %v418 = vpop.permute.xlu0 %417
  %v420 = vmul.f32 %v400, %v418
  %v422 = vrot.slane %v420, 2
  %423 = vrot.lane.b32.xlu0 %v422, 32
  %v424 = vpop.permute.xlu0 %423
  %v425 = vsel %vm49, %v424, 0
  %427 = vmatpush.msra.mxu0 0.0
  %428 = vmatpush.msra.mxu0 0.0
  %429 = vmatpush.msra.mxu0 0.0
  %430 = vmatpush.msra.mxu0 0.0
  %431 = vmatpush.msra.mxu0 0.0
  %432 = vmatpush.msra.mxu0 0.0
  %433 = vmatpush.msra.mxu0 0.0
  %434 = vmatpush.msra.mxu0 0.0
  %435 = vmatpush.msra.mxu0 0.0
  %436 = vmatpush.msra.mxu0 0.0
  %437 = vmatpush.msra.mxu0 0.0
  %438 = vmatpush.msra.mxu0 0.0
  %439 = vmatpush.msra.mxu0 %v283
  %440 = vmatpush.msra.mxu0 %v282
  %441 = vmatpush.msra.mxu0 %v281
  %442 = vmatpush.msra.mxu0 %v280
  %443 = vmatmul.f32.gmra.mxu0 %v425
  %v444 = vpop.f32.mrf.mxu0
  %v445 = vadd.f32 0.0, %v444
  %446 = vdwg.mxu0
  %v448 = vrot.slane %v445, 4
  %v450 = vadd.f32 %v275, %v448
  %v451 = vtanh.pop %v450
  %v452 = vxor.u32 %v450, 2147483648
  %v453 = vmul.f32 %v452, 1.442695
  %v454 = vpow.pop %v453
  %v455 = vadd.f32 %v454, 1.0
  %v456 = vrcp.pop %v455
  %v457 = vmul.f32 %v455, %v456
  %v458 = vsub.f32 1.0, %v457
  %v459 = vmul.f32 %v456, %v458
  %v460 = vadd.f32 %v456, %v459
  %vm461 = vweird.f32 %v455
  %vm462 = vweird.f32 %v456
  %vm463 = vmor %vm461, %vm462
  %v464 = vsel %vm463, %v456, %v460
  %v465 = vand.u32 2147483647, %v455
  %vm466 = vcmp.eq.f32.partialorder %v465, 8.507059e+37
  %v467 = vand.u32 %v455, 2147483648
  %v468 = vor.u32 1.1754944e-38, %v467
  %v469 = vsel %vm466, %v468, %v464
  %v470 = vmul.f32 1.0, %v469
  %v471 = vsel %vm288, %v451, %v470
  %v473 = vrot.slane %v414, 6
  %v475 = vmul.f32 %v471, %v473
  %477 = vrot.lane.b32.xlu0 %v471, 64
  %v478 = vpop.permute.xlu0 %477
  %v480 = vmul.f32 %v471, %v478
  %482 = vrot.lane.b32.xlu0 %v480, 32
  %v483 = vpop.permute.xlu0 %482
  %v485 = vadd.f32 %v475, %v483
  %v486 = vtanh.pop %v485
  %488 = vrot.lane.b32.xlu0 %v486, 64
  %v489 = vpop.permute.xlu0 %488
  %v491 = vmul.f32 %v471, %v489
  %v493 = vrot.slane %v491, 4
  %494 = vrot.lane.b32.xlu0 %v493, 32
  %v495 = vpop.permute.xlu0 %494
  %v496 = vsel %vm49, %v495, 0
  %498 = vmatpush.msra.mxu0 0.0
  %499 = vmatpush.msra.mxu0 0.0
  %500 = vmatpush.msra.mxu0 0.0
  %501 = vmatpush.msra.mxu0 0.0
  %502 = vmatpush.msra.mxu0 0.0
  %503 = vmatpush.msra.mxu0 0.0
  %504 = vmatpush.msra.mxu0 0.0
  %505 = vmatpush.msra.mxu0 0.0
  %506 = vmatpush.msra.mxu0 0.0
  %507 = vmatpush.msra.mxu0 0.0
  %508 = vmatpush.msra.mxu0 0.0
  %509 = vmatpush.msra.mxu0 0.0
  %510 = vmatpush.msra.mxu0 %v283
  %511 = vmatpush.msra.mxu0 %v282
  %512 = vmatpush.msra.mxu0 %v281
  %513 = vmatpush.msra.mxu0 %v280
  %514 = vmatmul.f32.gmra.mxu0 %v496
  %v515 = vpop.f32.mrf.mxu0
  %v516 = vadd.f32 0.0, %v515
  %517 = vdwg.mxu0
  %v519 = vrot.slane %v516, 2
  %v521 = vadd.f32 %v275, %v519
  %v522 = vtanh.pop %v521
  %v523 = vxor.u32 %v521, 2147483648
  %v524 = vmul.f32 %v523, 1.442695
  %v525 = vpow.pop %v524
  %v526 = vadd.f32 %v525, 1.0
  %v527 = vrcp.pop %v526
  %v528 = vmul.f32 %v526, %v527
  %v529 = vsub.f32 1.0, %v528
  %v530 = vmul.f32 %v527, %v529
  %v531 = vadd.f32 %v527, %v530
  %vm532 = vweird.f32 %v526
  %vm533 = vweird.f32 %v527
  %vm534 = vmor %vm532, %vm533
  %v535 = vsel %vm534, %v527, %v531
  %v536 = vand.u32 2147483647, %v526
  %vm537 = vcmp.eq.f32.partialorder %v536, 8.507059e+37
  %v538 = vand.u32 %v526, 2147483648
  %v539 = vor.u32 1.1754944e-38, %v538
  %v540 = vsel %vm537, %v539, %v535
  %v541 = vmul.f32 1.0, %v540
  %v542 = vsel %vm288, %v522, %v541
  %v544 = vrot.slane %v485, 6
  %v546 = vmul.f32 %v542, %v544
  %548 = vrot.lane.b32.xlu0 %v542, 64
  %v549 = vpop.permute.xlu0 %548
  %v551 = vmul.f32 %v542, %v549
  %553 = vrot.lane.b32.xlu0 %v551, 32
  %v554 = vpop.permute.xlu0 %553
  %v556 = vadd.f32 %v546, %v554
  %v557 = vtanh.pop %v556
  %559 = vrot.lane.b32.xlu0 %v557, 64
  %v560 = vpop.permute.xlu0 %559
  %v562 = vmul.f32 %v542, %v560
  %v564 = vrot.slane %v562, 6
  %565 = vrot.lane.b32.xlu0 %v564, 32
  %v566 = vpop.permute.xlu0 %565
  %v567 = vsel %vm49, %v566, 0
  %569 = vmatpush.msra.mxu0 0.0
  %570 = vmatpush.msra.mxu0 0.0
  %571 = vmatpush.msra.mxu0 0.0
  %572 = vmatpush.msra.mxu0 0.0
  %573 = vmatpush.msra.mxu0 0.0
  %574 = vmatpush.msra.mxu0 0.0
  %575 = vmatpush.msra.mxu0 0.0
  %576 = vmatpush.msra.mxu0 0.0
  %577 = vmatpush.msra.mxu0 0.0
  %578 = vmatpush.msra.mxu0 0.0
  %579 = vmatpush.msra.mxu0 0.0
  %580 = vmatpush.msra.mxu0 0.0
  %581 = vmatpush.msra.mxu0 %v283
  %582 = vmatpush.msra.mxu0 %v282
  %583 = vmatpush.msra.mxu0 %v281
  %584 = vmatpush.msra.mxu0 %v280
  %585 = vmatmul.f32.gmra.mxu0 %v567
  %v586 = vpop.f32.mrf.mxu0
  %v587 = vadd.f32 0.0, %v586
  %588 = vdwg.mxu0
  %v589 = vadd.f32 %v278, %v587
  %v590 = vtanh.pop %v589
  %v591 = vxor.u32 %v589, 2147483648
  %v592 = vmul.f32 %v591, 1.442695
  %v593 = vpow.pop %v592
  %v594 = vadd.f32 %v593, 1.0
  %v595 = vrcp.pop %v594
  %v596 = vmul.f32 %v594, %v595
  %v597 = vsub.f32 1.0, %v596
  %v598 = vmul.f32 %v595, %v597
  %v599 = vadd.f32 %v595, %v598
  %vm600 = vweird.f32 %v594
  %vm601 = vweird.f32 %v595
  %vm602 = vmor %vm600, %vm601
  %v603 = vsel %vm602, %v595, %v599
  %v604 = vand.u32 2147483647, %v594
  %vm605 = vcmp.eq.f32.partialorder %v604, 8.507059e+37
  %v606 = vand.u32 %v594, 2147483648
  %v607 = vor.u32 1.1754944e-38, %v606
  %v608 = vsel %vm605, %v607, %v603
  %v609 = vmul.f32 1.0, %v608
  %v610 = vsel %vm288, %v590, %v609
  %v612 = vrot.slane %v556, 6
  %v614 = vmul.f32 %v610, %v612
  %616 = vrot.lane.b32.xlu0 %v610, 64
  %v617 = vpop.permute.xlu0 %616
  %v619 = vmul.f32 %v610, %v617
  %621 = vrot.lane.b32.xlu0 %v619, 32
  %v622 = vpop.permute.xlu0 %621
  %v624 = vadd.f32 %v614, %v622
  %v625 = vtanh.pop %v624
  %627 = vrot.lane.b32.xlu0 %v625, 64
  %v628 = vpop.permute.xlu0 %627
  %v630 = vmul.f32 %v610, %v628
  %632 = vrot.lane.b32.xlu0 %v630, 32
  %v633 = vpop.permute.xlu0 %632
  %v634 = vsel %vm49, %v633, 0
  %636 = vmatpush.msra.mxu0 0.0
  %637 = vmatpush.msra.mxu0 0.0
  %638 = vmatpush.msra.mxu0 0.0
  %639 = vmatpush.msra.mxu0 0.0
  %640 = vmatpush.msra.mxu0 0.0
  %641 = vmatpush.msra.mxu0 0.0
  %642 = vmatpush.msra.mxu0 0.0
  %643 = vmatpush.msra.mxu0 0.0
  %644 = vmatpush.msra.mxu0 0.0
  %645 = vmatpush.msra.mxu0 0.0
  %646 = vmatpush.msra.mxu0 0.0
  %647 = vmatpush.msra.mxu0 0.0
  %648 = vmatpush.msra.mxu0 %v283
  %649 = vmatpush.msra.mxu0 %v282
  %650 = vmatpush.msra.mxu0 %v281
  %651 = vmatpush.msra.mxu0 %v280
  %652 = vmatmul.f32.gmra.mxu0 %v634
  %v653 = vpop.f32.mrf.mxu0
  %v654 = vadd.f32 0.0, %v653
  %655 = vdwg.mxu0
  %v657 = vrot.slane %v654, 6
  %v659 = vadd.f32 %v278, %v657
  %v660 = vtanh.pop %v659
  %v661 = vxor.u32 %v659, 2147483648
  %v662 = vmul.f32 %v661, 1.442695
  %v663 = vpow.pop %v662
  %v664 = vadd.f32 %v663, 1.0
  %v665 = vrcp.pop %v664
  %v666 = vmul.f32 %v664, %v665
  %v667 = vsub.f32 1.0, %v666
  %v668 = vmul.f32 %v665, %v667
  %v669 = vadd.f32 %v665, %v668
  %vm670 = vweird.f32 %v664
  %vm671 = vweird.f32 %v665
  %vm672 = vmor %vm670, %vm671
  %v673 = vsel %vm672, %v665, %v669
  %v674 = vand.u32 2147483647, %v664
  %vm675 = vcmp.eq.f32.partialorder %v674, 8.507059e+37
  %v676 = vand.u32 %v664, 2147483648
  %v677 = vor.u32 1.1754944e-38, %v676
  %v678 = vsel %vm675, %v677, %v673
  %v679 = vmul.f32 1.0, %v678
  %v680 = vsel %vm288, %v660, %v679
  %v682 = vrot.slane %v624, 6
  %v684 = vmul.f32 %v680, %v682
  %686 = vrot.lane.b32.xlu0 %v680, 64
  %v687 = vpop.permute.xlu0 %686
  %v689 = vmul.f32 %v680, %v687
  %691 = vrot.lane.b32.xlu0 %v689, 32
  %v692 = vpop.permute.xlu0 %691
  %v694 = vadd.f32 %v684, %v692
  %v695 = vtanh.pop %v694
  %697 = vrot.lane.b32.xlu0 %v695, 64
  %v698 = vpop.permute.xlu0 %697
  %v700 = vmul.f32 %v680, %v698
  %v702 = vrot.slane %v700, 2
  %703 = vrot.lane.b32.xlu0 %v702, 32
  %v704 = vpop.permute.xlu0 %703
  %v705 = vsel %vm49, %v704, 0
  %707 = vmatpush.msra.mxu0 0.0
  %708 = vmatpush.msra.mxu0 0.0
  %709 = vmatpush.msra.mxu0 0.0
  %710 = vmatpush.msra.mxu0 0.0
  %711 = vmatpush.msra.mxu0 0.0
  %712 = vmatpush.msra.mxu0 0.0
  %713 = vmatpush.msra.mxu0 0.0
  %714 = vmatpush.msra.mxu0 0.0
  %715 = vmatpush.msra.mxu0 0.0
  %716 = vmatpush.msra.mxu0 0.0
  %717 = vmatpush.msra.mxu0 0.0
  %718 = vmatpush.msra.mxu0 0.0
  %719 = vmatpush.msra.mxu0 %v283
  %720 = vmatpush.msra.mxu0 %v282
  %721 = vmatpush.msra.mxu0 %v281
  %722 = vmatpush.msra.mxu0 %v280
  %723 = vmatmul.f32.gmra.mxu0 %v705
  %v724 = vpop.f32.mrf.mxu0
  %v725 = vadd.f32 0.0, %v724
  %726 = vdwg.mxu0
  %v728 = vrot.slane %v725, 4
  %v730 = vadd.f32 %v278, %v728
  %v731 = vtanh.pop %v730
  %v732 = vxor.u32 %v730, 2147483648
  %v733 = vmul.f32 %v732, 1.442695
  %v734 = vpow.pop %v733
  %v735 = vadd.f32 %v734, 1.0
  %v736 = vrcp.pop %v735
  %v737 = vmul.f32 %v735, %v736
  %v738 = vsub.f32 1.0, %v737
  %v739 = vmul.f32 %v736, %v738
  %v740 = vadd.f32 %v736, %v739
  %vm741 = vweird.f32 %v735
  %vm742 = vweird.f32 %v736
  %vm743 = vmor %vm741, %vm742
  %v744 = vsel %vm743, %v736, %v740
  %v745 = vand.u32 2147483647, %v735
  %vm746 = vcmp.eq.f32.partialorder %v745, 8.507059e+37
  %v747 = vand.u32 %v735, 2147483648
  %v748 = vor.u32 1.1754944e-38, %v747
  %v749 = vsel %vm746, %v748, %v744
  %v750 = vmul.f32 1.0, %v749
  %v751 = vsel %vm288, %v731, %v750
  %v753 = vrot.slane %v694, 6
  %v755 = vmul.f32 %v751, %v753
  %757 = vrot.lane.b32.xlu0 %v751, 64
  %v758 = vpop.permute.xlu0 %757
  %v760 = vmul.f32 %v751, %v758
  %762 = vrot.lane.b32.xlu0 %v760, 32
  %v763 = vpop.permute.xlu0 %762
  %v765 = vadd.f32 %v755, %v763
  %v766 = vtanh.pop %v765
  %768 = vrot.lane.b32.xlu0 %v766, 64
  %v769 = vpop.permute.xlu0 %768
  %v771 = vmul.f32 %v751, %v769
  %v773 = vrot.slane %v771, 4
  %774 = vrot.lane.b32.xlu0 %v773, 32
  %v775 = vpop.permute.xlu0 %774
  %v776 = vsel %vm49, %v775, 0
  %778 = vmatpush.msra.mxu0 0.0
  %779 = vmatpush.msra.mxu0 0.0
  %780 = vmatpush.msra.mxu0 0.0
  %781 = vmatpush.msra.mxu0 0.0
  %782 = vmatpush.msra.mxu0 0.0
  %783 = vmatpush.msra.mxu0 0.0
  %784 = vmatpush.msra.mxu0 0.0
  %785 = vmatpush.msra.mxu0 0.0
  %786 = vmatpush.msra.mxu0 0.0
  %787 = vmatpush.msra.mxu0 0.0
  %788 = vmatpush.msra.mxu0 0.0
  %789 = vmatpush.msra.mxu0 0.0
  %790 = vmatpush.msra.mxu0 %v283
  %791 = vmatpush.msra.mxu0 %v282
  %792 = vmatpush.msra.mxu0 %v281
  %793 = vmatpush.msra.mxu0 %v280
  %794 = vmatmul.f32.gmra.mxu0 %v776
  %v795 = vpop.f32.mrf.mxu0
  %v796 = vadd.f32 0.0, %v795
  %797 = vdwg.mxu0
  %v799 = vrot.slane %v796, 2
  %v801 = vadd.f32 %v278, %v799
  %v802 = vtanh.pop %v801
  %v803 = vxor.u32 %v801, 2147483648
  %v804 = vmul.f32 %v803, 1.442695
  %v805 = vpow.pop %v804
  %v806 = vadd.f32 %v805, 1.0
  %v807 = vrcp.pop %v806
  %v808 = vmul.f32 %v806, %v807
  %v809 = vsub.f32 1.0, %v808
  %v810 = vmul.f32 %v807, %v809
  %v811 = vadd.f32 %v807, %v810
  %vm812 = vweird.f32 %v806
  %vm813 = vweird.f32 %v807
  %vm814 = vmor %vm812, %vm813
  %v815 = vsel %vm814, %v807, %v811
  %v816 = vand.u32 2147483647, %v806
  %vm817 = vcmp.eq.f32.partialorder %v816, 8.507059e+37
  %v818 = vand.u32 %v806, 2147483648
  %v819 = vor.u32 1.1754944e-38, %v818
  %v820 = vsel %vm817, %v819, %v815
  %v821 = vmul.f32 1.0, %v820
  %v822 = vsel %vm288, %v802, %v821
  %v824 = vrot.slane %v765, 6
  %v826 = vmul.f32 %v822, %v824
  %828 = vrot.lane.b32.xlu0 %v822, 64
  %v829 = vpop.permute.xlu0 %828
  %v831 = vmul.f32 %v822, %v829
  %833 = vrot.lane.b32.xlu0 %v831, 32
  %v834 = vpop.permute.xlu0 %833
  %v836 = vadd.f32 %v826, %v834
  %v837 = vtanh.pop %v836
  %839 = vrot.lane.b32.xlu0 %v837, 64
  %v840 = vpop.permute.xlu0 %839
  %v842 = vmul.f32 %v822, %v840
  %v843 = vld [vmem:[%s4] sm:$0xff]
  %v844 = vld [vmem:[%s4 + $0x8] sm:$0xff]
  %v845 = vld [vmem:[%s4 + $0x10] sm:$0xff]
  %v846 = vld [vmem:[%s4 + $0x18] sm:$0xff]
  %v847 = vld [vmem:[%s4 + $0x20] sm:$0xff]
  %v848 = vld [vmem:[%s4 + $0x28] sm:$0xff]
  %v849 = vld [vmem:[%s4 + $0x30] sm:$0xff]
  %v850 = vld [vmem:[%s4 + $0x38] sm:$0xff]
  %v851 = vld [vmem:[%s7] sm:$0x1]
  %v853 = vperm.slane %v851, 0
  %v855 = vsel %vm231, %v230, %v229
  %v856 = vsel %vm252, %v855, 0
  %858 = vmatpush.msra.mxu0 0.0
  %859 = vmatpush.msra.mxu0 0.0
  %860 = vmatpush.msra.mxu0 0.0
  %861 = vmatpush.msra.mxu0 0.0
  %862 = vmatpush.msra.mxu0 0.0
  %863 = vmatpush.msra.mxu0 0.0
  %864 = vmatpush.msra.mxu0 0.0
  %865 = vmatpush.msra.mxu0 0.0
  %866 = vmatpush.msra.mxu0 %v850
  %867 = vmatpush.msra.mxu0 %v849
  %868 = vmatpush.msra.mxu0 %v848
  %869 = vmatpush.msra.mxu0 %v847
  %870 = vmatpush.msra.mxu0 %v846
  %871 = vmatpush.msra.mxu0 %v845
  %872 = vmatpush.msra.mxu0 %v844
  %873 = vmatpush.msra.mxu0 %v843
  %874 = vmatmul.f32.gmra.mxu0 %v856
  %v875 = vpop.f32.mrf.mxu0
  %v876 = vadd.f32 %v853, %v875
  %877 = vdwg.mxu0
  %v878 = vtanh.pop %v876
  %v879 = vxor.u32 %v876, 2147483648
  %v880 = vmul.f32 %v879, 1.442695
  %v881 = vpow.pop %v880
  %v882 = vadd.f32 %v881, 1.0
  %v883 = vrcp.pop %v882
  %v884 = vmul.f32 %v882, %v883
  %v885 = vsub.f32 1.0, %v884
  %v886 = vmul.f32 %v883, %v885
  %v887 = vadd.f32 %v883, %v886
  %vm888 = vweird.f32 %v882
  %vm889 = vweird.f32 %v883
  %vm890 = vmor %vm888, %vm889
  %v891 = vsel %vm890, %v883, %v887
  %v892 = vand.u32 2147483647, %v882
  %vm893 = vcmp.eq.f32.partialorder %v892, 8.507059e+37
  %v894 = vand.u32 %v882, 2147483648
  %v895 = vor.u32 1.1754944e-38, %v894
  %v896 = vsel %vm893, %v895, %v891
  %v897 = vmul.f32 1.0, %v896
  %v898 = vsel %vm288, %v878, %v897
  %900 = vrot.lane.b32.xlu0 %v898, 64
  %v901 = vpop.permute.xlu0 %900
  %v903 = vmul.f32 %v898, %v901
  %v904 = vtanh.pop %v903
  %906 = vrot.lane.b32.xlu0 %v904, 96
  %v907 = vpop.permute.xlu0 %906
  %v909 = vmul.f32 %v898, %v907
  %911 = vrot.lane.b32.xlu0 %v842, 32
  %v912 = vpop.permute.xlu0 %911
  %v915 = vrot.slane %v909, 2
  %916 = vrot.lane.b32.xlu0 %v915, 64
  %v917 = vpop.permute.xlu0 %916
  %v919 = vsel %vm49, %v912, %v917
  %v920 = vld [vmem:[%s8] sm:$0x1]
  %v922 = vperm.slane %v920, 0
  %v924 = vmul.f32 %v919, %v922
  %vm925 = vcmask 523270
  %v926 = vsel %vm925, %v924, 0.0
  %927 = vadd.xlane.f32.xlu0 %v926
  %v928 = vpop.xlane.xlu0 %927
  %v929 = vld [vmem:[#allocation2] sm:$0x1]
  %v931 = vperm.slane %v929, 0
  %v933 = vadd.f32 %v928, %v931
  %vm934 = vcmask 7174
  %935 = vst.msk [vmem:[%s10 - $0x6] sm:$0xc0] %vm934, %v933
  // Predicated region
  $region42: #{pallas_forward.1} parent=0 // pred_check
    _
  $region43: #{pallas_forward.1} parent=0 // pred_check_branch
    %937 = sbr.rel (0) target = $region45
  $region44: #{pallas_forward.1} parent=0 // pred_region
    _
  $region45: #{pallas_forward.1} parent=0 // pred_fallthru
    _
  // Predicated region
  $region46: #{pallas_forward.1} parent=0 // pred_check
    _
  $region47: #{pallas_forward.1} parent=0 // pred_check_branch
    %939 = sbr.rel (0) target = $region49
  $region48: #{pallas_forward.1} parent=0 // pred_region
    _
  $region49: #{pallas_forward.1} parent=0 // pred_fallthru
    _

</llo_original>
